<compile_context>
chip_gen: v5e
topology: v5e:2x2
jax: 0.10.0
libtpu: 0.0.40
codegen_flags: <defaults>
</compile_context>

<pallas_src>
import numpy as np
import jax
import jax.numpy as jnp
from jax.experimental import pallas as pl
from jax.experimental.pallas import tpu as pltpu


def _make_logits_kernel(TR, spp, total_rows, need_mask):
    """Kernel computing per-part partial logits (sum_d x[b,d]*w[d]) for real & fake."""

    def kernel(real_ref, fake_ref, w_ref, out_r_ref, out_f_ref):
        # real_ref / fake_ref: (B, TR, 128) native dtype in VMEM
        # w_ref:               (TR, 128)    f32 in VMEM
        # out_r_ref/out_f_ref: (B, 1)       f32 (resident accumulator, per parallel part)
        p = pl.program_id(0)
        s = pl.program_id(1)

        @pl.when(s == 0)
        def _init():
            out_r_ref[...] = jnp.zeros_like(out_r_ref)
            out_f_ref[...] = jnp.zeros_like(out_f_ref)

        w = w_ref[...]                               # (TR, 128) f32
        xr = real_ref[...].astype(jnp.float32)       # per-tile upcast (native-dtype DMA)
        xf = fake_ref[...].astype(jnp.float32)

        prod_r = xr * w                              # VPU, broadcast over B
        prod_f = xf * w

        if need_mask:
            # Mask ragged / duplicated (clamped) boundary rows.
            gstep = p * spp + s
            row0 = gstep * TR
            row_ids = jax.lax.broadcasted_iota(jnp.int32, (1, TR, 1), 1) + row0
            valid = row_ids < total_rows
            prod_r = jnp.where(valid, prod_r, 0.0)
            prod_f = jnp.where(valid, prod_f, 0.0)

        # Reduce rows (sublanes) then lanes -> (B, 1) partial logits.
        out_r_ref[...] += jnp.sum(jnp.sum(prod_r, axis=1), axis=-1, keepdims=True)
        out_f_ref[...] += jnp.sum(jnp.sum(prod_f, axis=1), axis=-1, keepdims=True)

    return kernel


def _tile_rows(batch, rows, itemsize):
    """Pick the rows-per-step tile from the per-generation VMEM capacity."""
    try:
        vmem_cap = int(pltpu.get_tpu_info().vmem_capacity_bytes)
    except Exception:
        vmem_cap = 64 * 1024 * 1024          # conservative fallback (v7x per-TC VMEM)
    budget = min(int(vmem_cap * 0.40), 48 * 1024 * 1024)
    # Double-buffered footprint per 128-lane row: real + fake (native dtype) + f32 weight.
    per_row = 2 * (2 * batch * itemsize + 4) * 128
    tr_cap = max(8, (budget // per_row) // 8 * 8)
    if rows <= tr_cap:
        tr = int(rows)                       # single block == full rows axis (always legal)
    else:
        tr = int(tr_cap)                     # multiple of 8; ragged boundary masked in-kernel
    used = 2 * (2 * batch * itemsize + 4) * tr * 128
    vmem_limit = int(min(vmem_cap - (4 << 20), max(32 << 20, used + (8 << 20))))
    return tr, vmem_limit


def discriminator_loss(real_Y, fake_Y, level, disc_w, disc_b):
    """Pallas implementation of DiscriminatorLoss.forward.

    real_Y, fake_Y : [B, C, H, W] arrays (NCHW, native dtype — no upcast copy).
    level          : unused by the synthetic discriminator.
    disc_w, disc_b : synthetic discriminator parameters ([D, 1], [1]).
    Returns a scalar f32 loss = BCE(disc(real), 1) + BCE(disc(fake), 0).
    """
    # TODO(synk): `disc` is an external module in the original code; a deterministic
    # synthetic (flatten + linear + sigmoid) discriminator is used here and `level`
    # is accepted but ignored.
    del level
    B = int(real_Y.shape[0])
    D = int(np.prod(real_Y.shape[1:]))

    real_flat = real_Y.reshape(B, D)                       # native dtype
    fake_flat = fake_Y.reshape(B, D)
    w_flat = jnp.reshape(disc_w.astype(jnp.float32), (D,))

    if D % 128 != 0:
        # TODO(synk): ragged lane tail (<128 elems/row) pads inputs to the next
        # multiple of 128; only triggers when C*H*W is not 128-aligned.
        pad = 128 - D % 128
        real_flat = jnp.pad(real_flat, ((0, 0), (0, pad)))
        fake_flat = jnp.pad(fake_flat, ((0, 0), (0, pad)))
        w_flat = jnp.pad(w_flat, ((0, pad),))
        D += pad

    R = D // 128
    real3 = real_flat.reshape(B, R, 128)                   # free view, rows contiguous in HBM
    fake3 = fake_flat.reshape(B, R, 128)
    w3 = w_flat.reshape(R, 128)

    itemsize = int(np.dtype(real3.dtype).itemsize)
    TR, vmem_limit = _tile_rows(B, R, itemsize)
    steps_total = -(-R // TR)
    NP = 2 if steps_total >= 2 else 1                      # shard reduction across TCs (v7x)
    spp = -(-steps_total // NP)
    need_mask = (R % TR != 0) or (NP * spp != steps_total)
    last_block = steps_total - 1

    def x_map(p, s):
        return (0, jnp.minimum(p * spp + s, last_block), 0)

    def w_map(p, s):
        return (jnp.minimum(p * spp + s, last_block), 0)

    kernel = _make_logits_kernel(TR, spp, R, need_mask)

    out_r, out_f = pl.pallas_call(
        kernel,
        out_shape=(jax.ShapeDtypeStruct((NP, B, 1), jnp.float32),
                   jax.ShapeDtypeStruct((NP, B, 1), jnp.float32)),
        grid_spec=pltpu.PrefetchScalarGridSpec(
            num_scalar_prefetch=0,
            grid=(NP, spp),
            in_specs=[
                pl.BlockSpec((B, TR, 128), x_map),         # real tile (native dtype)
                pl.BlockSpec((B, TR, 128), x_map),         # fake tile (native dtype)
                pl.BlockSpec((TR, 128), w_map),            # f32 weight tile
            ],
            out_specs=[
                pl.BlockSpec((None, B, 1), lambda p, s: (p, 0, 0)),   # partial logits real
                pl.BlockSpec((None, B, 1), lambda p, s: (p, 0, 0)),   # partial logits fake
            ],
        ),
        compiler_params=pltpu.CompilerParams(
            dimension_semantics=("parallel", "arbitrary"),
            vmem_limit_bytes=vmem_limit,
        ),
    )(real3, fake3, w3)

    # Tiny epilogue on B scalars, kept in the wrapper so the row reduction can be
    # sharded across both TensorCores on v7x.
    b = disc_b.astype(jnp.float32).reshape(-1)[0]
    logits_r = jnp.sum(out_r, axis=0)[:, 0] + b            # (B,)
    logits_f = jnp.sum(out_f, axis=0)[:, 0] + b

    def softplus(z):
        return jnp.maximum(z, 0.0) + jnp.log1p(jnp.exp(-jnp.abs(z)))

    # nn.BCELoss clamps log at -100 => per-element loss capped at 100.
    loss_real = jnp.mean(jnp.minimum(softplus(-logits_r), 100.0))
    loss_fake = jnp.mean(jnp.minimum(softplus(logits_f), 100.0))
    return loss_real + loss_fake


def _reference_loss(real_Y, fake_Y, disc_w, disc_b):
    B = real_Y.shape[0]
    D = int(np.prod(real_Y.shape[1:]))
    w32 = disc_w.astype(jnp.float32)
    logits_r = real_Y.reshape(B, D).astype(jnp.float32) @ w32 + disc_b[0]
    logits_f = fake_Y.reshape(B, D).astype(jnp.float32) @ w32 + disc_b[0]
    p_r = jax.nn.sigmoid(logits_r)
    p_f = jax.nn.sigmoid(logits_f)
    loss_real = -jnp.mean(jnp.maximum(jnp.log(p_r), -100.0))
    loss_fake = -jnp.mean(jnp.maximum(jnp.log(1.0 - p_f), -100.0))
    return loss_real + loss_fake


if __name__ == "__main__":
    key = jax.random.PRNGKey(0)
    k_real, k_fake, k_w = jax.random.split(key, 3)

    B, C, H, W = 2, 4, 16, 16
    D = C * H * W
    level = 0

    real_Y = jax.random.normal(k_real, (B, C, H, W), dtype=jnp.float32)
    fake_Y = jax.random.normal(k_fake, (B, C, H, W), dtype=jnp.float32)

    # Deterministic synthetic discriminator parameters.
    disc_w = jax.random.normal(k_w, (D, 1), dtype=jnp.float32) * 0.02
    disc_b = jnp.zeros((1,), dtype=jnp.float32)

    loss = discriminator_loss(real_Y, fake_Y, level, disc_w, disc_b)
    loss = jax.block_until_ready(loss)

    ref = _reference_loss(real_Y, fake_Y, disc_w, disc_b)
    assert jnp.allclose(loss, ref, rtol=1e-5, atol=1e-5), (loss, ref)

    print("KERNEL_OK")
</pallas_src>

<mosaic_0001>
module attributes {stable_mosaic.version = 11 : i64} {
  func.func @kernel(%arg0: i32, %arg1: i32, %arg2: memref<2x8x128xf32, #tpu.memory_space<vmem>>, %arg3: memref<2x8x128xf32, #tpu.memory_space<vmem>>, %arg4: memref<8x128xf32, #tpu.memory_space<vmem>>, %arg5: memref<1x2x1xf32, #tpu.memory_space<vmem>>, %arg6: memref<1x2x1xf32, #tpu.memory_space<vmem>>) attributes {dimension_semantics = [#tpu.dimension_semantics<parallel>, #tpu.dimension_semantics<arbitrary>], iteration_bounds = array<i64: 1, 1>, scalar_prefetch = 0 : i64, scratch_operands = 0 : i64, tpu.core_type = #tpu.core_type<tc>, window_params = [{transform_indices = @transform_0, window_bounds = array<i64: 2, 8, 128>}, {transform_indices = @transform_1, window_bounds = array<i64: 2, 8, 128>}, {transform_indices = @transform_2, window_bounds = array<i64: 8, 128>}, {transform_indices = @transform_3, window_bounds = array<i64: 1, 2, 1>}, {transform_indices = @transform_4, window_bounds = array<i64: 1, 2, 1>}]} {
    %c0_i32 = arith.constant 0 : i32
    %0 = arith.cmpi eq, %arg1, %c0_i32 : i32
    %1 = arith.extui %0 : i1 to i32
    %c0_i32_0 = arith.constant 0 : i32
    %2 = arith.cmpi ne, %1, %c0_i32_0 : i32
    scf.if %2 {
      %cst_23 = arith.constant 0.000000e+00 : f32
      %30 = vector.broadcast %cst_23 : f32 to vector<2x1xf32>
      %c0_24 = arith.constant 0 : index
      %c0_25 = arith.constant 0 : index
      %c0_26 = arith.constant 0 : index
      %31 = vector.load %arg5[%c0_24, %c0_25, %c0_26] : memref<1x2x1xf32, #tpu.memory_space<vmem>>, vector<1x2x1xf32>
      %32 = vector.shape_cast %31 : vector<1x2x1xf32> to vector<2x1xf32>
      %33 = vector.shape_cast %30 : vector<2x1xf32> to vector<1x2x1xf32>
      tpu.vector_store %arg5[%c0_24, %c0_25, %c0_26], %33 {strides = array<i32>} : memref<1x2x1xf32, #tpu.memory_space<vmem>>, vector<1x2x1xf32>,
      %cst_27 = arith.constant 0.000000e+00 : f32
      %34 = vector.broadcast %cst_27 : f32 to vector<2x1xf32>
      %c0_28 = arith.constant 0 : index
      %c0_29 = arith.constant 0 : index
      %c0_30 = arith.constant 0 : index
      %35 = vector.load %arg6[%c0_28, %c0_29, %c0_30] : memref<1x2x1xf32, #tpu.memory_space<vmem>>, vector<1x2x1xf32>
      %36 = vector.shape_cast %35 : vector<1x2x1xf32> to vector<2x1xf32>
      %37 = vector.shape_cast %34 : vector<2x1xf32> to vector<1x2x1xf32>
      tpu.vector_store %arg6[%c0_28, %c0_29, %c0_30], %37 {strides = array<i32>} : memref<1x2x1xf32, #tpu.memory_space<vmem>>, vector<1x2x1xf32>,
    } else {
    }
    %c0 = arith.constant 0 : index
    %c0_1 = arith.constant 0 : index
    %3 = vector.load %arg4[%c0, %c0_1] : memref<8x128xf32, #tpu.memory_space<vmem>>, vector<8x128xf32>
    %c0_2 = arith.constant 0 : index
    %c0_3 = arith.constant 0 : index
    %c0_4 = arith.constant 0 : index
    %4 = vector.load %arg2[%c0_2, %c0_3, %c0_4] : memref<2x8x128xf32, #tpu.memory_space<vmem>>, vector<2x8x128xf32>
    %c0_5 = arith.constant 0 : index
    %c0_6 = arith.constant 0 : index
    %c0_7 = arith.constant 0 : index
    %5 = vector.load %arg3[%c0_5, %c0_6, %c0_7] : memref<2x8x128xf32, #tpu.memory_space<vmem>>, vector<2x8x128xf32>
    %6 = vector.shape_cast %3 : vector<8x128xf32> to vector<1x8x128xf32>
    %7 = vector.broadcast %6 : vector<1x8x128xf32> to vector<2x8x128xf32>
    %8 = arith.mulf %4, %7 : vector<2x8x128xf32>
    %9 = vector.shape_cast %3 : vector<8x128xf32> to vector<1x8x128xf32>
    %10 = vector.broadcast %9 : vector<1x8x128xf32> to vector<2x8x128xf32>
    %11 = arith.mulf %5, %10 : vector<2x8x128xf32>
    %c0_8 = arith.constant 0 : index
    %c0_9 = arith.constant 0 : index
    %c0_10 = arith.constant 0 : index
    %12 = vector.load %arg5[%c0_8, %c0_9, %c0_10] : memref<1x2x1xf32, #tpu.memory_space<vmem>>, vector<1x2x1xf32>
    %13 = vector.shape_cast %12 : vector<1x2x1xf32> to vector<2x1xf32>
    %cst = arith.constant dense<0.000000e+00> : vector<2x128xf32>
    %14 = vector.multi_reduction <add>, %8, %cst [1] : vector<2x8x128xf32> to vector<2x128xf32>
    %cst_11 = arith.constant dense<0.000000e+00> : vector<2xf32>
    %15 = vector.multi_reduction <add>, %14, %cst_11 [1] : vector<2x128xf32> to vector<2xf32>
    %16 = vector.shape_cast %15 : vector<2xf32> to vector<2x1xf32>
    %17 = arith.addf %13, %16 : vector<2x1xf32>
    %c0_12 = arith.constant 0 : index
    %c0_13 = arith.constant 0 : index
    %c0_14 = arith.constant 0 : index
    %18 = vector.load %arg5[%c0_12, %c0_13, %c0_14] : memref<1x2x1xf32, #tpu.memory_space<vmem>>, vector<1x2x1xf32>
    %19 = vector.shape_cast %18 : vector<1x2x1xf32> to vector<2x1xf32>
    %20 = vector.shape_cast %17 : vector<2x1xf32> to vector<1x2x1xf32>
    tpu.vector_store %arg5[%c0_12, %c0_13, %c0_14], %20 {strides = array<i32>} : memref<1x2x1xf32, #tpu.memory_space<vmem>>, vector<1x2x1xf32>,
    %c0_15 = arith.constant 0 : index
    %c0_16 = arith.constant 0 : index
    %c0_17 = arith.constant 0 : index
    %21 = vector.load %arg6[%c0_15, %c0_16, %c0_17] : memref<1x2x1xf32, #tpu.memory_space<vmem>>, vector<1x2x1xf32>
    %22 = vector.shape_cast %21 : vector<1x2x1xf32> to vector<2x1xf32>
    %cst_18 = arith.constant dense<0.000000e+00> : vector<2x128xf32>
    %23 = vector.multi_reduction <add>, %11, %cst_18 [1] : vector<2x8x128xf32> to vector<2x128xf32>
    %cst_19 = arith.constant dense<0.000000e+00> : vector<2xf32>
    %24 = vector.multi_reduction <add>, %23, %cst_19 [1] : vector<2x128xf32> to vector<2xf32>
    %25 = vector.shape_cast %24 : vector<2xf32> to vector<2x1xf32>
    %26 = arith.addf %22, %25 : vector<2x1xf32>
    %c0_20 = arith.constant 0 : index
    %c0_21 = arith.constant 0 : index
    %c0_22 = arith.constant 0 : index
    %27 = vector.load %arg6[%c0_20, %c0_21, %c0_22] : memref<1x2x1xf32, #tpu.memory_space<vmem>>, vector<1x2x1xf32>
    %28 = vector.shape_cast %27 : vector<1x2x1xf32> to vector<2x1xf32>
    %29 = vector.shape_cast %26 : vector<2x1xf32> to vector<1x2x1xf32>
    tpu.vector_store %arg6[%c0_20, %c0_21, %c0_22], %29 {strides = array<i32>} : memref<1x2x1xf32, #tpu.memory_space<vmem>>, vector<1x2x1xf32>,
    return
  }
  func.func @transform_0(%arg0: i32, %arg1: i32) -> (i32, i32, i32) {
    %c1_i32 = arith.constant 1 : i32
    %0 = arith.muli %arg0, %c1_i32 : i32
    %1 = arith.addi %0, %arg1 : i32
    %c0_i32 = arith.constant 0 : i32
    %2 = arith.minsi %1, %c0_i32 : i32
    %c0_i32_0 = arith.constant 0 : i32
    %c0_i32_1 = arith.constant 0 : i32
    %c0_i32_2 = arith.constant 0 : i32
    return %c0_i32_0, %2, %c0_i32_1 : i32, i32, i32
  }
  func.func @transform_1(%arg0: i32, %arg1: i32) -> (i32, i32, i32) {
    %c1_i32 = arith.constant 1 : i32
    %0 = arith.muli %arg0, %c1_i32 : i32
    %1 = arith.addi %0, %arg1 : i32
    %c0_i32 = arith.constant 0 : i32
    %2 = arith.minsi %1, %c0_i32 : i32
    %c0_i32_0 = arith.constant 0 : i32
    %c0_i32_1 = arith.constant 0 : i32
    %c0_i32_2 = arith.constant 0 : i32
    return %c0_i32_0, %2, %c0_i32_1 : i32, i32, i32
  }
  func.func @transform_2(%arg0: i32, %arg1: i32) -> (i32, i32) {
    %c1_i32 = arith.constant 1 : i32
    %0 = arith.muli %arg0, %c1_i32 : i32
    %1 = arith.addi %0, %arg1 : i32
    %c0_i32 = arith.constant 0 : i32
    %2 = arith.minsi %1, %c0_i32 : i32
    %c0_i32_0 = arith.constant 0 : i32
    %c0_i32_1 = arith.constant 0 : i32
    return %2, %c0_i32_0 : i32, i32
  }
  func.func @transform_3(%arg0: i32, %arg1: i32) -> (i32, i32, i32) {
    %c0_i32 = arith.constant 0 : i32
    %c0_i32_0 = arith.constant 0 : i32
    %c0_i32_1 = arith.constant 0 : i32
    return %arg0, %c0_i32, %c0_i32_0 : i32, i32, i32
  }
  func.func @transform_4(%arg0: i32, %arg1: i32) -> (i32, i32, i32) {
    %c0_i32 = arith.constant 0 : i32
    %c0_i32_0 = arith.constant 0 : i32
    %c0_i32_1 = arith.constant 0 : i32
    return %arg0, %c0_i32, %c0_i32_0 : i32, i32, i32
  }
}

</mosaic_0001>

<llo_original>
// kernel: tpu_custom_call.1
$region0: #{tpu_custom_call.1}
  #allocation0 [shape = 'u32[]', space=smem, size = 0x4, offset = 0x4, fixed_abs, tag = 'smem constant byte address 0x4 - core index']
  #allocation1 [shape = 'u32[72,128]{1,0:T(1,128)}', space=vmem, size = 0x9000, scoped, tag = 'internal scratch']
  %s0 = inlined_call_operand.hbm [shape: f32[2,8,128], index: 0, kind: input, shape index: {}]
  %s1 = inlined_call_operand.hbm [shape: f32[2,8,128], index: 1, kind: input, shape index: {}]
  %s2 = inlined_call_operand.hbm [shape: f32[8,128], index: 2, kind: input, shape index: {}]
  %s3 = inlined_call_operand.vmem [shape: f32[1,2,1], index: 3, kind: output, shape index: {0}]
  %s4 = inlined_call_operand.vmem [shape: f32[1,2,1], index: 4, kind: output, shape index: {1}]
  %5 = xla_tuple %s3, %s4
  %s6 = sld [smem:[#allocation0]]
  $region46: #{tpu_custom_call.1} parent=0
    _
  %s8 = ssub.s32 1, %s6
  %s9 = scalar_select 0, %s8, %s6
  $region1: #{tpu_custom_call.1} parent=0
    #allocation2 [shape = 'u8[8192]{0}', space=vmem, size = 0x2000, scoped, tag = 'input window, operand 0, single buffered']
    #allocation3 [shape = 's32[1]{0}', space=sflag, size = 0x4, scoped, tag = 'scoped memory for tpu_custom_call.1']
    #allocation4 [shape = 'u8[8192]{0}', space=vmem, size = 0x2000, scoped, tag = 'input window, operand 1, single buffered']
    #allocation5 [shape = 's32[1]{0}', space=sflag, size = 0x4, scoped, tag = 'scoped memory for tpu_custom_call.1']
    #allocation6 [shape = 'u8[4096]{0}', space=vmem, size = 0x1000, scoped, tag = 'input window, operand 2, single buffered']
    %10 = vsyncpa [#allocation3], 0
    %11 = vsyncpa [#allocation5], 0
    // Predicated region
    $region2: #{tpu_custom_call.1} parent=1 // pred_check
      _
    $region3: #{tpu_custom_call.1} parent=1 // pred_check_branch
      %13 = sbr.rel (0) target = $region5
    $region4: #{tpu_custom_call.1} parent=1 // pred_region
      %s14 = sadd.s32 0, 0
      %p15 = scmp.lt.s32.totalorder %s14, 0
      %s16 = scalar_select %p15, %s14, 0
      %18 = vsyncadd [#allocation3], 0
      %s19 = smul.addr %s16, 8
      %s20 = scalar_lea.hbm %s0, %s19
      %s21 = sshll.u32 %s20, 4
      %s22 = int_to_ptr.hbm [resolvable:$true] %s21
      %s23 = sshll.u32 [#allocation2], 4
      %s24 = int_to_ptr.vmem [resolvable:$true] %s23
      %29 = dma.hbm_to_vmem [thread:$0]  %s22, 256, %s24, [#allocation3], 128, 128, 8
    $region5: #{tpu_custom_call.1} parent=1 // pred_fallthru
      _
    // Predicated region
    $region6: #{tpu_custom_call.1} parent=1 // pred_check
      _
    $region7: #{tpu_custom_call.1} parent=1 // pred_check_branch
      %31 = sbr.rel (0) target = $region9
    $region8: #{tpu_custom_call.1} parent=1 // pred_region
      %s32 = sadd.s32 0, 0
      %p33 = scmp.lt.s32.totalorder %s32, 0
      %s34 = scalar_select %p33, %s32, 0
      %36 = vsyncadd [#allocation5], 0
      %s37 = smul.addr %s34, 8
      %s38 = scalar_lea.hbm %s1, %s37
      %s39 = sshll.u32 %s38, 4
      %s40 = int_to_ptr.hbm [resolvable:$true] %s39
      %s41 = sshll.u32 [#allocation4], 4
      %s42 = int_to_ptr.vmem [resolvable:$true] %s41
      %47 = dma.hbm_to_vmem [thread:$0]  %s40, 256, %s42, [#allocation5], 128, 128, 8
    $region9: #{tpu_custom_call.1} parent=1 // pred_fallthru
      _
    // Predicated region
    $region10: #{tpu_custom_call.1} parent=1 // pred_check
      _
    $region11: #{tpu_custom_call.1} parent=1 // pred_check_branch
      %49 = sbr.rel (0) target = $region13
    $region12: #{tpu_custom_call.1} parent=1 // pred_region
      %s50 = sadd.s32 0, 0
      %p51 = scmp.lt.s32.totalorder %s50, 0
      %s52 = scalar_select %p51, %s50, 0
      %54 = vsyncadd [#allocation5], 0
      %s55 = smul.addr %s52, 8
      %s56 = scalar_lea.hbm %s2, %s55
      %s58 = sshll.u32 %s56, 4
      %s59 = int_to_ptr.hbm [resolvable:$true] %s58
      %s60 = sshll.u32 [#allocation6], 4
      %s61 = int_to_ptr.vmem [resolvable:$true] %s60
      %63 = dma.hbm_to_vmem [thread:$0]  %s59, 128, %s61, [#allocation5]
    $region13: #{tpu_custom_call.1} parent=1 // pred_fallthru
      _
    // Predicated region
    $region14: #{tpu_custom_call.1} parent=1 // pred_check
      _
    $region15: #{tpu_custom_call.1} parent=1 // pred_check_branch
      %65 = sbr.rel (0) target = $region17
    $region16: #{tpu_custom_call.1} parent=1 // pred_region
      %67 = dma.done [#allocation3], 256
    $region17: #{tpu_custom_call.1} parent=1 // pred_fallthru
      _
    // Predicated region
    $region18: #{tpu_custom_call.1} parent=1 // pred_check
      _
    $region19: #{tpu_custom_call.1} parent=1 // pred_check_branch
      %69 = sbr.rel (0) target = $region21
    $region20: #{tpu_custom_call.1} parent=1 // pred_region
      %71 = dma.done [#allocation5], 256
    $region21: #{tpu_custom_call.1} parent=1 // pred_fallthru
      _
    // Predicated region
    $region22: #{tpu_custom_call.1} parent=1 // pred_check
      _
    $region23: #{tpu_custom_call.1} parent=1 // pred_check_branch
      %73 = sbr.rel (0) target = $region25
    $region24: #{tpu_custom_call.1} parent=1 // pred_region
      %75 = dma.done [#allocation5], 128
    $region25: #{tpu_custom_call.1} parent=1 // pred_fallthru
      _
    %s76 = sadd.s32 0, 0
    %p77 = scmp.lt.s32.totalorder %s76, 0
    %s78 = scalar_select %p77, %s76, 0
    %s79 = sadd.s32 0, 0
    %p80 = scmp.lt.s32.totalorder %s79, 0
    %s81 = scalar_select %p80, %s79, 0
    %s82 = sadd.s32 0, 0
    %p83 = scmp.lt.s32.totalorder %s82, 0
    %s84 = scalar_select %p83, %s82, 0
    %p85 = scmp.eq.s32.totalorder 0, 0
    // Predicated region
    $region26: #{tpu_custom_call.1} parent=1 // pred_check
      %p86 = pneg %p85
    $region27: #{tpu_custom_call.1} parent=1 // pred_check_branch
      %88 = sbr.rel (%p86) target = $region29
    $region28: #{tpu_custom_call.1} parent=1 // pred_region
      %vm89 = vcmask 1024
      %90 = vst.msk [vmem:[%s3] sm:$0x3] %vm89, 0.0
      %91 = vst.msk [vmem:[%s4] sm:$0x3] %vm89, 0.0
    $region29: #{tpu_custom_call.1} parent=1 // pred_fallthru
      _
    %v92 = vld [vmem:[#allocation6] sm:$0xff]
    %v93 = vld [vmem:[#allocation2] sm:$0xff]
    %v94 = vld [vmem:[#allocation2 + $0x8] sm:$0xff]
    %v95 = vld [vmem:[#allocation4] sm:$0xff]
    %v96 = vld [vmem:[#allocation4 + $0x8] sm:$0xff]
    %v97 = vmul.f32 %v93, %v92
    %v98 = vmul.f32 %v94, %v92
    %v99 = vmul.f32 %v95, %v92
    %v100 = vmul.f32 %v96, %v92
    %v101 = vld [vmem:[%s3] sm:$0x3]
    %v102 = vrot.slane %v97, 4
    %v103 = vadd.f32 %v97, %v102
    %v104 = vrot.slane %v103, 2
    %v105 = vadd.f32 %v103, %v104
    %v106 = vrot.slane %v105, 1
    %v107 = vadd.f32 %v105, %v106
    %v108 = vrot.slane %v98, 4
    %v109 = vadd.f32 %v98, %v108
    %v110 = vrot.slane %v109, 2
    %v111 = vadd.f32 %v109, %v110
    %v112 = vrot.slane %v111, 1
    %v113 = vadd.f32 %v111, %v112
    %vm116 = vcmask 1041409
    %v117 = vsel %vm116, %v113, %v107
    %vm119 = vcmask 1041408
    %v120 = vsel %vm119, %v117, 0.0
    %121 = vadd.xlane.f32.xlu0 %v120
    %v122 = vpop.xlane.xlu0 %121
    %v123 = vadd.f32 %v101, %v122
    %vm124 = vcmask 1024
    %125 = vst.msk [vmem:[%s3] sm:$0x3] %vm124, %v123
    %v126 = vld [vmem:[%s4] sm:$0x3]
    %v127 = vrot.slane %v99, 4
    %v128 = vadd.f32 %v99, %v127
    %v129 = vrot.slane %v128, 2
    %v130 = vadd.f32 %v128, %v129
    %v131 = vrot.slane %v130, 1
    %v132 = vadd.f32 %v130, %v131
    %v133 = vrot.slane %v100, 4
    %v134 = vadd.f32 %v100, %v133
    %v135 = vrot.slane %v134, 2
    %v136 = vadd.f32 %v134, %v135
    %v137 = vrot.slane %v136, 1
    %v138 = vadd.f32 %v136, %v137
    %v141 = vsel %vm116, %v138, %v132
    %v143 = vsel %vm119, %v141, 0.0
    %144 = vadd.xlane.f32.xlu0 %v143
    %v145 = vpop.xlane.xlu0 %144
    %v146 = vadd.f32 %v126, %v145
    %147 = vst.msk [vmem:[%s4] sm:$0x3] %vm124, %v146
    // Predicated region
    $region30: #{tpu_custom_call.1} parent=1 // pred_check
      _
    $region31: #{tpu_custom_call.1} parent=1 // pred_check_branch
      %149 = sbr.rel (0) target = $region33
    $region32: #{tpu_custom_call.1} parent=1 // pred_region
      _
    $region33: #{tpu_custom_call.1} parent=1 // pred_fallthru
      _
    // Predicated region
    $region34: #{tpu_custom_call.1} parent=1 // pred_check
      _
    $region35: #{tpu_custom_call.1} parent=1 // pred_check_branch
      %151 = sbr.rel (0) target = $region37
    $region36: #{tpu_custom_call.1} parent=1 // pred_region
      _
    $region37: #{tpu_custom_call.1} parent=1 // pred_fallthru
      _
    // Predicated region
    $region38: #{tpu_custom_call.1} parent=1 // pred_check
      _
    $region39: #{tpu_custom_call.1} parent=1 // pred_check_branch
      %153 = sbr.rel (0) target = $region41
    $region40: #{tpu_custom_call.1} parent=1 // pred_region
      _
    $region41: #{tpu_custom_call.1} parent=1 // pred_fallthru
      _
    // Predicated region
    $region42: #{tpu_custom_call.1} parent=1 // pred_check
      _
    $region43: #{tpu_custom_call.1} parent=1 // pred_check_branch
      %155 = sbr.rel (0) target = $region45
    $region44: #{tpu_custom_call.1} parent=1 // pred_region
      _
    $region45: #{tpu_custom_call.1} parent=1 // pred_fallthru
      _
    %156 = vsyncpa [#allocation3], 1
    %157 = vsyncpa [#allocation5], 1

</llo_original>
